<compile_context>
chip_gen: v7x
topology: tpu7x:2x2x1
jax: 0.10.0
libtpu: 0.0.40
codegen_flags: <defaults>
</compile_context>

<pallas_src>
import jax
import jax.numpy as jnp
from jax.experimental import pallas as pl
from jax.experimental.pallas import tpu as pltpu


def _make_seq_ce_kernel(C, tile_c, needs_c_mask):
    """Build the kernel; C / tile_c / needs_c_mask are static Python values."""

    def kernel(logits_ref, tgt_ref, loss_ref, m_ref, s_ref, p_ref):
        # logits_ref : (tile_c, tile_l) input dtype  -- classes on sublanes
        # tgt_ref    : (1, tile_l) int32
        # loss_ref   : (1, tile_l) float32           -- per-element NLL
        # m/s/p_ref  : (1, tile_l) float32 scratch   -- running max / exp-sum / picked
        ci = pl.program_id(2)

        @pl.when(ci == 0)
        def _init():
            m_ref[...] = jnp.full_like(m_ref, -jnp.inf)
            s_ref[...] = jnp.zeros_like(s_ref)
            p_ref[...] = jnp.zeros_like(p_ref)

        x = logits_ref[...]                 # raw input dtype (bf16 stays packed)
        t = tgt_ref[...]                    # (1, tile_l)

        # global class id of every sublane row of this block: (tile_c, 1) column,
        # broadcast through the compares instead of materializing a (C, TL) iota
        cls = jax.lax.broadcasted_iota(jnp.int32, (tile_c, 1), 0) + ci * tile_c

        if needs_c_mask:
            # last C block runs past C: padded rows hold garbage -> mask them out
            x_m = jnp.where(cls < C, x, jnp.asarray(-jnp.inf, dtype=x.dtype))
        else:
            x_m = x

        # ---- online logsumexp over the class (sublane) axis ----
        # block max in the raw dtype (exact); only the (1, tile_l) row is cast
        bmax = jnp.max(x_m, axis=0, keepdims=True).astype(jnp.float32)
        m_old = m_ref[...]
        m_new = jnp.maximum(m_old, bmax)
        e = jnp.exp(x_m.astype(jnp.float32) - m_new)     # masked rows -> exp(-inf)=0
        # TODO(synk): if profiling shows the VALU saturating (bf16, v6e/v7x), push
        #             this class-axis sum to the idle MXU as ones(1,tile_c) @ e.
        s_ref[...] = s_ref[...] * jnp.exp(m_old - m_new) + jnp.sum(
            e, axis=0, keepdims=True)
        m_ref[...] = m_new

        # ---- one-hot pick of the target logit, on the raw-dtype values ----
        # exactly one class matches (exact even in bf16); padded rows have
        # cls >= C and never match an in-range target
        picked = jnp.sum(
            jnp.where(cls == t, x, jnp.asarray(0, dtype=x.dtype)),
            axis=0, keepdims=True,
        ).astype(jnp.float32)
        p_ref[...] = p_ref[...] + picked

        @pl.when(ci == pl.num_programs(2) - 1)
        def _finalize():
            loss_ref[...] = m_ref[...] + jnp.log(s_ref[...]) - p_ref[...]

    return kernel


def _vmem_budgets(itemsize):
    """Generation-aware (scoped VMEM limit, per-logits-block byte budget)."""
    try:
        cap = int(pltpu.get_tpu_info().vmem_capacity_bytes)
    except Exception:
        cap = 64 * 1024 * 1024                       # conservative (v7x-sized)
    if cap >= 128 * 1024 * 1024:                     # v5e / v6e: 128 MiB physical
        limit = 100 * 1024 * 1024
    else:                                            # v7x: 64 MiB physical
        limit = 40 * 1024 * 1024
    # steady state ~= 2x logits block (double buffer) + ~2 full-block f32 temps
    factor = 2 + (2 * 4) // itemsize                 # f32 -> 4x, bf16 -> 6x
    block_budget = (limit * 3 // 4) // factor
    return limit, block_budget


def _choose_tiles(C, L, itemsize, block_budget):
    """Pick (tile_c, tile_l): lane tile a multiple of 128 (or full L), class tile a
    multiple of the sublane packing (or full C), logits block <= block_budget."""
    sub = max(8, 32 // itemsize)                     # 8 f32 / 16 bf16 / 32 int8
    c_pad = -(-C // sub) * sub
    l_pad = -(-L // 128) * 128

    if c_pad * l_pad * itemsize <= block_budget:     # whole (C, L) slab fits
        return C, L

    tile_l = L if L <= 512 else 512                  # >=512 lanes for DMA contiguity
    tl_pad = -(-tile_l // 128) * 128
    tile_c = (block_budget // (tl_pad * itemsize)) // sub * sub
    tile_c = max(sub, min(tile_c, c_pad))
    if tile_c >= C:
        tile_c = C
    return tile_c, tile_l


def sequence_cross_entropy_loss(inputs, targets, *, tile_c=None, tile_l=None):
    """inputs: (N, C, L) float logits, targets: (N, L) int -> scalar sum(CE) / N."""
    N, C, L = inputs.shape
    itemsize = jnp.dtype(inputs.dtype).itemsize

    vmem_limit, block_budget = _vmem_budgets(itemsize)
    auto_c, auto_l = _choose_tiles(C, L, itemsize, block_budget)
    tile_c = auto_c if tile_c is None else tile_c
    tile_l = auto_l if tile_l is None else tile_l
    # lane dim of a block must be a multiple of 128 or equal the full extent;
    # class dim must be a multiple of 8 or equal the full extent
    assert tile_l == L or tile_l % 128 == 0
    assert tile_c == C or tile_c % 8 == 0
    needs_c_mask = (C % tile_c) != 0

    grid = (N, pl.cdiv(L, tile_l), pl.cdiv(C, tile_c))

    # targets as (N, 1, L) int32: tiny copy, gives a lane-dense block
    tgt3 = targets.reshape(N, 1, L).astype(jnp.int32)

    losses = pl.pallas_call(
        _make_seq_ce_kernel(C, tile_c, needs_c_mask),
        out_shape=jax.ShapeDtypeStruct((N, 1, L), jnp.float32),
        grid=grid,
        in_specs=[
            pl.BlockSpec((None, tile_c, tile_l), lambda n, li, ci: (n, ci, li)),
            pl.BlockSpec((None, 1, tile_l), lambda n, li, ci: (n, 0, li)),
        ],
        out_specs=pl.BlockSpec((None, 1, tile_l), lambda n, li, ci: (n, 0, li)),
        scratch_shapes=[
            pltpu.VMEM((1, tile_l), jnp.float32),    # running max
            pltpu.VMEM((1, tile_l), jnp.float32),    # running exp-sum
            pltpu.VMEM((1, tile_l), jnp.float32),    # picked target logit
        ],
        compiler_params=pltpu.CompilerParams(
            # class axis carries the online-logsumexp state -> "arbitrary";
            # batch / sequence axes are independent -> "parallel" (v7x megacore)
            dimension_semantics=("parallel", "parallel", "arbitrary"),
            vmem_limit_bytes=vmem_limit,
        ),
    )(inputs, tgt3)

    # final reduction + batch normalization outside the kernel
    return jnp.sum(losses) / jnp.float32(N)


def _reference(inputs, targets):
    # pure-JAX reference: cross_entropy(inputs (N,C,L), targets (N,L)) summed / N
    x = jnp.transpose(inputs, (0, 2, 1)).astype(jnp.float32)   # (N, L, C)
    logp = jax.nn.log_softmax(x, axis=-1)
    nll = -jnp.take_along_axis(logp, targets[..., None].astype(jnp.int32), axis=-1)
    return jnp.sum(nll) / inputs.shape[0]


if __name__ == "__main__":
    key = jax.random.PRNGKey(0)
    k1, k2, k3, k4 = jax.random.split(key, 4)

    # Case 1: small shapes consistent with the module (single full-C block path)
    N, C, L = 2, 32, 8
    inputs = jax.random.normal(k1, (N, C, L), dtype=jnp.float32)
    targets = jax.random.randint(k2, (N, L), 0, C, dtype=jnp.int32)
    out = jax.block_until_ready(sequence_cross_entropy_loss(inputs, targets))
    ref = _reference(inputs, targets)
    assert jnp.allclose(out, ref, rtol=1e-5, atol=1e-5), (out, ref)

    # Case 2: force the C-tiled online-logsumexp path with a padded final class
    # block and a padded final sequence tile (exercises the masking paths)
    N2, C2, L2 = 2, 37, 130
    inputs2 = jax.random.normal(k3, (N2, C2, L2), dtype=jnp.float32)
    targets2 = jax.random.randint(k4, (N2, L2), 0, C2, dtype=jnp.int32)
    out2 = jax.block_until_ready(
        sequence_cross_entropy_loss(inputs2, targets2, tile_c=16, tile_l=128))
    ref2 = _reference(inputs2, targets2)
    assert jnp.allclose(out2, ref2, rtol=1e-5, atol=1e-4), (out2, ref2)

    print("KERNEL_OK")
</pallas_src>

<mosaic_0001>
module attributes {stable_mosaic.version = 11 : i64} {
  func.func @kernel(%arg0: i32, %arg1: i32, %arg2: i32, %arg3: memref<1x32x8xf32, #tpu.memory_space<vmem>>, %arg4: memref<1x1x8xi32, #tpu.memory_space<vmem>>, %arg5: memref<1x1x8xf32, #tpu.memory_space<vmem>>, %arg6: memref<1x8xf32, #tpu.memory_space<vmem>>, %arg7: memref<1x8xf32, #tpu.memory_space<vmem>>, %arg8: memref<1x8xf32, #tpu.memory_space<vmem>>) attributes {dimension_semantics = [#tpu.dimension_semantics<parallel>, #tpu.dimension_semantics<parallel>, #tpu.dimension_semantics<arbitrary>], iteration_bounds = array<i64: 2, 1, 1>, scalar_prefetch = 0 : i64, scratch_operands = 3 : i64, tpu.core_type = #tpu.core_type<tc>, window_params = [{transform_indices = @transform_0, window_bounds = array<i64: 1, 32, 8>}, {transform_indices = @transform_1, window_bounds = array<i64: 1, 1, 8>}, {transform_indices = @transform_2, window_bounds = array<i64: 1, 1, 8>}]} {
    %c0_i32 = arith.constant 0 : i32
    %0 = arith.cmpi eq, %arg2, %c0_i32 : i32
    %1 = arith.extui %0 : i1 to i32
    %c0_i32_0 = arith.constant 0 : i32
    %2 = arith.cmpi ne, %1, %c0_i32_0 : i32
    scf.if %2 {
      %cst_23 = arith.constant 0xFF800000 : f32
      %40 = vector.broadcast %cst_23 : f32 to vector<1x8xf32>
      %c0_24 = arith.constant 0 : index
      %c0_25 = arith.constant 0 : index
      %41 = vector.load %arg6[%c0_24, %c0_25] : memref<1x8xf32, #tpu.memory_space<vmem>>, vector<1x8xf32>
      tpu.vector_store %arg6[%c0_24, %c0_25], %40 {strides = array<i32>} : memref<1x8xf32, #tpu.memory_space<vmem>>, vector<1x8xf32>,
      %cst_26 = arith.constant 0.000000e+00 : f32
      %42 = vector.broadcast %cst_26 : f32 to vector<1x8xf32>
      %c0_27 = arith.constant 0 : index
      %c0_28 = arith.constant 0 : index
      %43 = vector.load %arg7[%c0_27, %c0_28] : memref<1x8xf32, #tpu.memory_space<vmem>>, vector<1x8xf32>
      tpu.vector_store %arg7[%c0_27, %c0_28], %42 {strides = array<i32>} : memref<1x8xf32, #tpu.memory_space<vmem>>, vector<1x8xf32>,
      %cst_29 = arith.constant 0.000000e+00 : f32
      %44 = vector.broadcast %cst_29 : f32 to vector<1x8xf32>
      %c0_30 = arith.constant 0 : index
      %c0_31 = arith.constant 0 : index
      %45 = vector.load %arg8[%c0_30, %c0_31] : memref<1x8xf32, #tpu.memory_space<vmem>>, vector<1x8xf32>
      tpu.vector_store %arg8[%c0_30, %c0_31], %44 {strides = array<i32>} : memref<1x8xf32, #tpu.memory_space<vmem>>, vector<1x8xf32>,
    } else {
    }
    %c0 = arith.constant 0 : index
    %c0_1 = arith.constant 0 : index
    %c0_2 = arith.constant 0 : index
    %3 = vector.load %arg3[%c0, %c0_1, %c0_2] : memref<1x32x8xf32, #tpu.memory_space<vmem>>, vector<1x32x8xf32>
    %4 = vector.shape_cast %3 : vector<1x32x8xf32> to vector<32x8xf32>
    %c0_3 = arith.constant 0 : index
    %c0_4 = arith.constant 0 : index
    %c0_5 = arith.constant 0 : index
    %5 = vector.load %arg4[%c0_3, %c0_4, %c0_5] : memref<1x1x8xi32, #tpu.memory_space<vmem>>, vector<1x1x8xi32>
    %6 = vector.shape_cast %5 : vector<1x1x8xi32> to vector<1x8xi32>
    %7 = tpu.iota {dimensions = array<i32: 0>} : vector<32x1xi32>
    %c32_i32 = arith.constant 32 : i32
    %8 = arith.muli %arg2, %c32_i32 : i32
    %9 = vector.broadcast %8 : i32 to vector<32x1xi32>
    %10 = arith.addi %7, %9 : vector<32x1xi32>
    %cst = arith.constant dense<0xFF800000> : vector<8xf32>
    %11 = vector.multi_reduction <maximumf>, %4, %cst [0] : vector<32x8xf32> to vector<8xf32>
    %12 = vector.shape_cast %11 : vector<8xf32> to vector<1x8xf32>
    %c0_6 = arith.constant 0 : index
    %c0_7 = arith.constant 0 : index
    %13 = vector.load %arg6[%c0_6, %c0_7] : memref<1x8xf32, #tpu.memory_space<vmem>>, vector<1x8xf32>
    %14 = arith.maximumf %13, %12 : vector<1x8xf32>
    %15 = vector.broadcast %14 : vector<1x8xf32> to vector<32x8xf32>
    %16 = arith.subf %4, %15 : vector<32x8xf32>
    %17 = math.exp %16 : vector<32x8xf32>
    %c0_8 = arith.constant 0 : index
    %c0_9 = arith.constant 0 : index
    %18 = vector.load %arg7[%c0_8, %c0_9] : memref<1x8xf32, #tpu.memory_space<vmem>>, vector<1x8xf32>
    %19 = arith.subf %13, %14 : vector<1x8xf32>
    %20 = math.exp %19 : vector<1x8xf32>
    %21 = arith.mulf %18, %20 : vector<1x8xf32>
    %cst_10 = arith.constant dense<0.000000e+00> : vector<8xf32>
    %22 = vector.multi_reduction <add>, %17, %cst_10 [0] : vector<32x8xf32> to vector<8xf32>
    %23 = vector.shape_cast %22 : vector<8xf32> to vector<1x8xf32>
    %24 = arith.addf %21, %23 : vector<1x8xf32>
    %c0_11 = arith.constant 0 : index
    %c0_12 = arith.constant 0 : index
    %25 = vector.load %arg7[%c0_11, %c0_12] : memref<1x8xf32, #tpu.memory_space<vmem>>, vector<1x8xf32>
    tpu.vector_store %arg7[%c0_11, %c0_12], %24 {strides = array<i32>} : memref<1x8xf32, #tpu.memory_space<vmem>>, vector<1x8xf32>,
    %c0_13 = arith.constant 0 : index
    %c0_14 = arith.constant 0 : index
    %26 = vector.load %arg6[%c0_13, %c0_14] : memref<1x8xf32, #tpu.memory_space<vmem>>, vector<1x8xf32>
    tpu.vector_store %arg6[%c0_13, %c0_14], %14 {strides = array<i32>} : memref<1x8xf32, #tpu.memory_space<vmem>>, vector<1x8xf32>,
    %27 = vector.broadcast %10 : vector<32x1xi32> to vector<32x8xi32>
    %28 = vector.broadcast %6 : vector<1x8xi32> to vector<32x8xi32>
    %29 = arith.cmpi eq, %27, %28 : vector<32x8xi32>
    %cst_15 = arith.constant 0.000000e+00 : f32
    %30 = vector.broadcast %cst_15 : f32 to vector<32x8xf32>
    %31 = arith.select %29, %4, %30 : vector<32x8xi1>, vector<32x8xf32>
    %cst_16 = arith.constant dense<0.000000e+00> : vector<8xf32>
    %32 = vector.multi_reduction <add>, %31, %cst_16 [0] : vector<32x8xf32> to vector<8xf32>
    %33 = vector.shape_cast %32 : vector<8xf32> to vector<1x8xf32>
    %c0_17 = arith.constant 0 : index
    %c0_18 = arith.constant 0 : index
    %34 = vector.load %arg8[%c0_17, %c0_18] : memref<1x8xf32, #tpu.memory_space<vmem>>, vector<1x8xf32>
    %35 = arith.addf %34, %33 : vector<1x8xf32>
    %c0_19 = arith.constant 0 : index
    %c0_20 = arith.constant 0 : index
    %36 = vector.load %arg8[%c0_19, %c0_20] : memref<1x8xf32, #tpu.memory_space<vmem>>, vector<1x8xf32>
    tpu.vector_store %arg8[%c0_19, %c0_20], %35 {strides = array<i32>} : memref<1x8xf32, #tpu.memory_space<vmem>>, vector<1x8xf32>,
    %c0_i32_21 = arith.constant 0 : i32
    %37 = arith.cmpi eq, %arg2, %c0_i32_21 : i32
    %38 = arith.extui %37 : i1 to i32
    %c0_i32_22 = arith.constant 0 : i32
    %39 = arith.cmpi ne, %38, %c0_i32_22 : i32
    scf.if %39 {
      %c0_23 = arith.constant 0 : index
      %c0_24 = arith.constant 0 : index
      %40 = vector.load %arg6[%c0_23, %c0_24] : memref<1x8xf32, #tpu.memory_space<vmem>>, vector<1x8xf32>
      %c0_25 = arith.constant 0 : index
      %c0_26 = arith.constant 0 : index
      %41 = vector.load %arg7[%c0_25, %c0_26] : memref<1x8xf32, #tpu.memory_space<vmem>>, vector<1x8xf32>
      %42 = math.log %41 : vector<1x8xf32>
      %43 = arith.addf %40, %42 : vector<1x8xf32>
      %c0_27 = arith.constant 0 : index
      %c0_28 = arith.constant 0 : index
      %44 = vector.load %arg8[%c0_27, %c0_28] : memref<1x8xf32, #tpu.memory_space<vmem>>, vector<1x8xf32>
      %45 = arith.subf %43, %44 : vector<1x8xf32>
      %c0_29 = arith.constant 0 : index
      %c0_30 = arith.constant 0 : index
      %c0_31 = arith.constant 0 : index
      %46 = vector.load %arg5[%c0_29, %c0_30, %c0_31] : memref<1x1x8xf32, #tpu.memory_space<vmem>>, vector<1x1x8xf32>
      %47 = vector.shape_cast %46 : vector<1x1x8xf32> to vector<1x8xf32>
      %48 = vector.shape_cast %45 : vector<1x8xf32> to vector<1x1x8xf32>
      tpu.vector_store %arg5[%c0_29, %c0_30, %c0_31], %48 {strides = array<i32>} : memref<1x1x8xf32, #tpu.memory_space<vmem>>, vector<1x1x8xf32>,
    } else {
    }
    return
  }
  func.func @transform_0(%arg0: i32, %arg1: i32, %arg2: i32) -> (i32, i32, i32) {
    %c0_i32 = arith.constant 0 : i32
    return %arg0, %arg2, %arg1 : i32, i32, i32
  }
  func.func @transform_1(%arg0: i32, %arg1: i32, %arg2: i32) -> (i32, i32, i32) {
    %c0_i32 = arith.constant 0 : i32
    %c0_i32_0 = arith.constant 0 : i32
    return %arg0, %c0_i32, %arg1 : i32, i32, i32
  }
  func.func @transform_2(%arg0: i32, %arg1: i32, %arg2: i32) -> (i32, i32, i32) {
    %c0_i32 = arith.constant 0 : i32
    %c0_i32_0 = arith.constant 0 : i32
    return %arg0, %c0_i32, %arg1 : i32, i32, i32
  }
}

</mosaic_0001>

<llo_original>
// kernel: tpu_custom_call.1
$region0: #{tpu_custom_call.1}
  #allocation0 [shape = 'u32[]', space=smem, size = 0x4, offset = 0x4, fixed_abs, tag = 'smem constant byte address 0x4 - core index']
  #allocation1 [shape = 'u32[144,128]{1,0:T(1,128)}', space=vmem, size = 0x12000, scoped, tag = 'internal scratch']
  #allocation2 [shape = 'f32[1,8]{1,0:T(1,128)}', space=vmem, size = 0x200, scoped, tag = 'scratch operand']
  #allocation3 [shape = 'f32[1,8]{1,0:T(1,128)}', space=vmem, size = 0x200, scoped, tag = 'scratch operand']
  #allocation4 [shape = 'f32[1,8]{1,0:T(1,128)}', space=vmem, size = 0x200, scoped, tag = 'scratch operand']
  %s0 = inlined_call_operand.vmem [shape: f32[2,32,8], index: 0, kind: input, shape index: {}]
  %s1 = inlined_call_operand.vmem [shape: s32[2,1,8], index: 1, kind: input, shape index: {}]
  %s2 = inlined_call_operand.hbm [shape: f32[2,1,8], index: 2, kind: output, shape index: {}]
  %s3 = sld [smem:[#allocation0]]
  $region49: #{tpu_custom_call.1} parent=0
    _
  %s5 = ssub.s32 1, %s3
  %s6 = scalar_select 0, %s5, %s3
  $region1: #{tpu_custom_call.1} parent=0
    #allocation5 [shape = 'u8[1024]{0}', space=vmem, size = 0x400, scoped, tag = 'output window, operand 0']
    #allocation6 [shape = 's32[2]{0}', space=sflag, size = 0x8, scoped, tag = 'scoped memory for tpu_custom_call.1']
    %7 = vsyncpa [#allocation6], 0
    %s8 = scalar_lea.sflag [#allocation6], 1
    %9 = vsyncpa %s8, 0
    loop: start=0, step=1, limit=4
    $region2: #{tpu_custom_call.1} parent=1 // loop_pre_header
      _
    $region3: #{tpu_custom_call.1} parent=1 // loop_header
      %s11 = sphi 0, %s15
      %p12 = scmp.ge.s32.totalorder %s11, 4
      %s18 = sphi 0, %s37
      %s19 = sphi 0, %s33
      %s20 = sphi 0, %s29
      %s21 = sphi 0, %s18
      %s22 = sphi 0, %s19
      %s23 = sphi 0, %s20
      %s24 = sphi 0, %s21
      %s25 = sphi 0, %s22
      %s26 = sphi 0, %s23
      %s44 = sphi 0, %s46
      %s47 = sphi 0, %s44
      %s48 = sphi 0, %s47
      %s64 = sphi 0, %s48
      %s72 = sphi 0, %s74
      %s75 = sphi 0, %s72
      %s76 = sphi 0, %s75
      %s92 = sphi 0, %s76
      %s100 = sphi 0, %s102
      %s103 = sphi 0, %s100
      %s104 = sphi 0, %s103
      %s120 = sphi 0, %s104
    $region4: #{tpu_custom_call.1} parent=1 // loop_header_branch
      %14 = sbr.rel (%p12) target = $region8
    $region5: #{tpu_custom_call.1} parent=1 // loop_body
      %s16 = ssub.s32 %s11, 1
      %s17 = ssub.s32 %s11, 2
      %s27 = sadd.s32 1, %s20
      %p28 = scmp.ge.s32.totalorder %s27, 1
      %s29 = scalar_select %p28, 0, %s27
      %s30 = sadd.s32 1, %s19
      %s31 = scalar_select %p28, %s30, %s19
      %p32 = scmp.ge.s32.totalorder %s31, 1
      %s33 = scalar_select %p32, 0, %s31
      %s34 = sadd.s32 1, %s18
      %s35 = scalar_select %p32, %s34, %s18
      %p36 = scmp.ge.s32.totalorder %s35, 2
      %s37 = scalar_select %p36, 0, %s35
      %s38 = ssub.s32 %s18, %s37
      %s39 = ssub.s32 %s20, %s29
      %s40 = sor.u32 %s38, %s39
      %s41 = ssub.s32 %s19, %s33
      %s42 = sor.u32 %s40, %s41
      %p43 = scmp.eq.s32.totalorder %s42, 0
      %s45 = sadd.s32 %s44, 1
      %s46 = scalar_select %p43, %s44, %s45
      %p49 = pneg %p43
      %p50 = scmp.eq.s32.totalorder %s11, 1
      %p51 = por %p49, %p50
      %p52 = scmp.ne.s32.totalorder %s44, %s47
      %p53 = scmp.eq.s32.totalorder %s11, 0
      %p54 = por %p52, %p53
      %p55 = scmp.ne.s32.totalorder %s44, %s47
      %p56 = scmp.eq.s32.totalorder %s16, 1
      %p57 = por %p55, %p56
      %p58 = scmp.ne.s32.totalorder %s47, %s48
      %p59 = scmp.eq.s32.totalorder %s16, 0
      %p60 = por %p58, %p59
      %p61 = scmp.ne.s32.totalorder %s47, %s48
      %p62 = scmp.eq.s32.totalorder %s17, 1
      %p63 = por %p61, %p62
      %p65 = scmp.ne.s32.totalorder %s48, %s64
      %p66 = scmp.eq.s32.totalorder %s17, 0
      %p67 = por %p65, %p66
      %s68 = ssub.s32 %s18, %s37
      %s69 = ssub.s32 %s19, %s33
      %s70 = sor.u32 %s68, %s69
      %p71 = scmp.eq.s32.totalorder %s70, 0
      %s73 = sadd.s32 %s72, 1
      %s74 = scalar_select %p71, %s72, %s73
      %p77 = pneg %p71
      %p78 = scmp.eq.s32.totalorder %s11, 1
      %p79 = por %p77, %p78
      %p80 = scmp.ne.s32.totalorder %s72, %s75
      %p81 = scmp.eq.s32.totalorder %s11, 0
      %p82 = por %p80, %p81
      %p83 = scmp.ne.s32.totalorder %s72, %s75
      %p84 = scmp.eq.s32.totalorder %s16, 1
      %p85 = por %p83, %p84
      %p86 = scmp.ne.s32.totalorder %s75, %s76
      %p87 = scmp.eq.s32.totalorder %s16, 0
      %p88 = por %p86, %p87
      %p89 = scmp.ne.s32.totalorder %s75, %s76
      %p90 = scmp.eq.s32.totalorder %s17, 1
      %p91 = por %p89, %p90
      %p93 = scmp.ne.s32.totalorder %s76, %s92
      %p94 = scmp.eq.s32.totalorder %s17, 0
      %p95 = por %p93, %p94
      %s96 = ssub.s32 %s18, %s37
      %s97 = ssub.s32 %s19, %s33
      %s98 = sor.u32 %s96, %s97
      %p99 = scmp.eq.s32.totalorder %s98, 0
      %s101 = sadd.s32 %s100, 1
      %s102 = scalar_select %p99, %s100, %s101
      %p105 = pneg %p99
      %p106 = scmp.eq.s32.totalorder %s11, 1
      %p107 = por %p105, %p106
      %p108 = scmp.ne.s32.totalorder %s100, %s103
      %p109 = scmp.eq.s32.totalorder %s11, 0
      %p110 = por %p108, %p109
      %p111 = scmp.ne.s32.totalorder %s100, %s103
      %p112 = scmp.eq.s32.totalorder %s16, 1
      %p113 = por %p111, %p112
      %p114 = scmp.ne.s32.totalorder %s103, %s104
      %p115 = scmp.eq.s32.totalorder %s16, 0
      %p116 = por %p114, %p115
      %p117 = scmp.ne.s32.totalorder %s103, %s104
      %p118 = scmp.eq.s32.totalorder %s17, 1
      %p119 = por %p117, %p118
      %p121 = scmp.ne.s32.totalorder %s104, %s120
      %p122 = scmp.eq.s32.totalorder %s17, 0
      %p123 = por %p121, %p122
      %p124 = scmp.le.s32.totalorder 1, %s11
      %p125 = scmp.lt.s32.totalorder %s11, 3
      %p126 = pnand %p124, %p125
      %p127 = pneg %p126
      // Predicated region
      $region9: #{tpu_custom_call.1} parent=5 // pred_check
        _
      $region10: #{tpu_custom_call.1} parent=5 // pred_check_branch
        %129 = sbr.rel (%p126) target = $region12
      $region11: #{tpu_custom_call.1} parent=5 // pred_region
        %s130 = ssub.s32 %s11, 1
      $region12: #{tpu_custom_call.1} parent=5 // pred_fallthru
        _
      %p131 = scmp.lt.s32.totalorder %s11, 2
      // Predicated region
      $region13: #{tpu_custom_call.1} parent=5 // pred_check
        %p132 = pneg %p131
      $region14: #{tpu_custom_call.1} parent=5 // pred_check_branch
        %134 = sbr.rel (%p132) target = $region16
      $region15: #{tpu_custom_call.1} parent=5 // pred_region
        // Predicated region
        $region17: #{tpu_custom_call.1} parent=15 // pred_check
          %p135 = pneg %p54
        $region18: #{tpu_custom_call.1} parent=15 // pred_check_branch
          %137 = sbr.rel (%p135) target = $region20
        $region19: #{tpu_custom_call.1} parent=15 // pred_region
          %s138 = smul.u32 4, %s20
          %p139 = scmp.lt.s32.totalorder %s18, 1
          %s140 = scalar_select %p139, %s18, 1
          %p141 = scmp.lt.s32.totalorder %s138, 3
          %s142 = scalar_select %p141, %s138, 3
          %p143 = scmp.lt.s32.totalorder %s19, 0
          %s144 = scalar_select %p143, %s19, 0
          %s145 = sadd.s32 %s144, %s142
          %s146 = smul.addr %s140, 4
          %s147 = sadd.s32 %s145, %s146
          %s148 = smul.addr %s147, 8
          %s149 = scalar_lea.vmem %s0, %s148
          %s150 = smul.u32 4, %s20
        $region20: #{tpu_custom_call.1} parent=15 // pred_fallthru
          _
        // Predicated region
        $region21: #{tpu_custom_call.1} parent=15 // pred_check
          %p151 = pneg %p82
        $region22: #{tpu_custom_call.1} parent=15 // pred_check_branch
          %153 = sbr.rel (%p151) target = $region24
        $region23: #{tpu_custom_call.1} parent=15 // pred_region
          %p154 = scmp.lt.s32.totalorder %s18, 1
          %s155 = scalar_select %p154, %s18, 1
          %p156 = scmp.lt.s32.totalorder %s19, 0
          %s157 = scalar_select %p156, %s19, 0
          %s158 = sadd.s32 %s157, %s155
          %s159 = scalar_lea.vmem %s1, %s158
        $region24: #{tpu_custom_call.1} parent=15 // pred_fallthru
          _
      $region16: #{tpu_custom_call.1} parent=5 // pred_fallthru
        _
      %p160 = scmp.le.s32.totalorder 1, %s11
      %p161 = scmp.lt.s32.totalorder %s11, 3
      %p162 = pnand %p160, %p161
      %p163 = pneg %p162
      // Predicated region
      $region25: #{tpu_custom_call.1} parent=5 // pred_check
        _
      $region26: #{tpu_custom_call.1} parent=5 // pred_check_branch
        %165 = sbr.rel (%p162) target = $region28
      $region27: #{tpu_custom_call.1} parent=5 // pred_region
        %s166 = ssub.s32 %s11, 1
        %s167 = smul.u32 4, %s23
        %p168 = scmp.lt.s32.totalorder %s21, 1
        %s169 = scalar_select %p168, %s21, 1
        %p170 = scmp.lt.s32.totalorder %s167, 3
        %s171 = scalar_select %p170, %s167, 3
        %p172 = scmp.lt.s32.totalorder %s22, 0
        %s173 = scalar_select %p172, %s22, 0
        %s174 = sadd.s32 %s173, %s171
        %s175 = smul.addr %s169, 4
        %s176 = sadd.s32 %s174, %s175
        %s177 = smul.addr %s176, 8
        %s178 = scalar_lea.vmem %s0, %s177
        %p179 = pneg %p60
        %p180 = pneg %p57
        %p181 = scmp.lt.s32.totalorder %s21, 1
        %s182 = scalar_select %p181, %s21, 1
        %p183 = scmp.lt.s32.totalorder %s22, 0
        %s184 = scalar_select %p183, %s22, 0
        %s185 = sadd.s32 %s184, %s182
        %s186 = scalar_lea.vmem %s1, %s185
        %p187 = pneg %p88
        %p188 = pneg %p85
        %p189 = pneg %p116
        %p190 = pneg %p113
        %s191 = sand.u32 %s103, 1
        %s192 = scalar_lea.sflag [#allocation6], %s191
        %s193 = sand.u32 %s103, 1
        %s194 = scalar_lea.vmem [#allocation5], %s193
        %s195 = smul.u32 4, %s23
        %p196 = scmp.lt.s32.totalorder %s21, 1
        %s197 = scalar_select %p196, %s21, 1
        %p198 = scmp.lt.s32.totalorder %s195, 3
        %s199 = scalar_select %p198, %s195, 3
        %p200 = scmp.lt.s32.totalorder %s22, 0
        %s201 = scalar_select %p200, %s22, 0
        %s202 = sadd.s32 %s201, %s199
        %s203 = smul.addr %s197, 4
        %s204 = sadd.s32 %s202, %s203
        %s205 = smul.addr %s204, 8
        %s206 = scalar_lea.vmem %s0, %s205
        %s207 = smul.u32 4, %s23
        %p208 = scmp.lt.s32.totalorder %s21, 1
        %s209 = scalar_select %p208, %s21, 1
        %p210 = scmp.lt.s32.totalorder %s22, 0
        %s211 = scalar_select %p210, %s22, 0
        %s212 = sadd.s32 %s211, %s209
        %s213 = scalar_lea.vmem %s1, %s212
        %p214 = scmp.eq.s32.totalorder %s23, 0
        // Predicated region
        $region29: #{tpu_custom_call.1} parent=27 // pred_check
          %p215 = pneg %p214
        $region30: #{tpu_custom_call.1} parent=27 // pred_check_branch
          %217 = sbr.rel (%p215) target = $region32
        $region31: #{tpu_custom_call.1} parent=27 // pred_region
          %vm218 = vcmask 57344
          %219 = vst.msk [vmem:[#allocation2] sm:$0x1] %vm218, -inf
          %220 = vst.msk [vmem:[#allocation3] sm:$0x1] %vm218, 0.0
          %221 = vst.msk [vmem:[#allocation4] sm:$0x1] %vm218, 0.0
        $region32: #{tpu_custom_call.1} parent=27 // pred_fallthru
          _
        %v222 = vld [vmem:[%s206] sm:$0xff]
        %v223 = vld [vmem:[%s206 + $0x8] sm:$0xff]
        %v224 = vld [vmem:[%s206 + $0x10] sm:$0xff]
        %v225 = vld [vmem:[%s206 + $0x18] sm:$0xff]
        %v226 = vld [vmem:[%s213] sm:$0x1]
        %v227 = vlaneseq
        %v228 = vshrl.u32 %v227, 7
        %v229 = vadd.s32 %v228, 8
        %v230 = vadd.s32 %v228, 16
        %v231 = vadd.s32 %v228, 24
        %s232 = smul.u32 %s23, 32
        %v233 = vstv %s232
        %v234 = vadd.s32 %v228, %v233
        %v235 = vadd.s32 %v229, %v233
        %v236 = vadd.s32 %v230, %v233
        %v237 = vadd.s32 %v231, %v233
        %vm238 = vcmask 64512
        %v239 = vsel %vm238, %v222, -inf
        %v240 = vsel %vm238, %v223, -inf
        %v241 = vsel %vm238, %v224, -inf
        %v242 = vsel %vm238, %v225, -inf
        %v243 = vmax.f32 %v239, %v240
        %v244 = vmax.f32 %v241, %v242
        %v245 = vmax.f32 %v243, %v244
        %v246 = vrot.slane %v245, 4
        %v247 = vmax.f32 %v245, %v246
        %v248 = vrot.slane %v247, 2
        %v249 = vmax.f32 %v247, %v248
        %v250 = vrot.slane %v249, 1
        %v251 = vmax.f32 %v249, %v250
        %v252 = vld [vmem:[#allocation2] sm:$0x1]
        %v253 = vmax.f32 %v252, %v251
        %v255 = vlaneseq
        %v256 = vshrl.u32 %v255, 7
        %v257 = vsub.s32 0, %v256
        %v258 = vrot.slane %v253, %v257
        %v260 = vsub.f32 %v222, %v258
        %v261 = vsub.f32 %v223, %v258
        %v262 = vsub.f32 %v224, %v258
        %v263 = vsub.f32 %v225, %v258
        %v264 = vmul.f32 %v260, 1.442695
        %v265 = vpow.pop %v264
        %v266 = vmul.f32 %v261, 1.442695
        %v267 = vpow.pop %v266
        %v268 = vmul.f32 %v262, 1.442695
        %v269 = vpow.pop %v268
        %v270 = vmul.f32 %v263, 1.442695
        %v271 = vpow.pop %v270
        %v272 = vld [vmem:[#allocation3] sm:$0x1]
        %v273 = vsub.f32 %v252, %v253
        %v274 = vmul.f32 %v273, 1.442695
        %v275 = vpow.pop %v274
        %v276 = vmul.f32 %v272, %v275
        %v277 = vsel %vm238, %v265, 0.0
        %v278 = vsel %vm238, %v267, 0.0
        %v279 = vadd.f32 %v277, %v278
        %v280 = vsel %vm238, %v269, 0.0
        %v281 = vadd.f32 %v279, %v280
        %v282 = vsel %vm238, %v271, 0.0
        %v283 = vadd.f32 %v281, %v282
        %v284 = vrot.slane %v283, 4
        %v285 = vadd.f32 %v283, %v284
        %v286 = vrot.slane %v285, 2
        %v287 = vadd.f32 %v285, %v286
        %v288 = vrot.slane %v287, 1
        %v289 = vadd.f32 %v287, %v288
        %v290 = vadd.f32 %v276, %v289
        %vm291 = vcmask 57344
        %292 = vst.msk [vmem:[#allocation3] sm:$0x1] %vm291, %v290
        %293 = vst.msk [vmem:[#allocation2] sm:$0x1] %vm291, %v253
        %v294 = vlaneseq
        %v295 = vshrl.u32 %v294, 7
        %v296 = vsub.s32 0, %v295
        %v297 = vrot.slane %v226, %v296
        %vm298 = vcmp.eq.s32.totalorder %v234, %v297
        %vm299 = vcmp.eq.s32.totalorder %v235, %v297
        %vm300 = vcmp.eq.s32.totalorder %v236, %v297
        %vm301 = vcmp.eq.s32.totalorder %v237, %v297
        %v302 = vsel %vm298, %v222, 0.0
        %v303 = vsel %vm299, %v223, 0.0
        %v304 = vsel %vm300, %v224, 0.0
        %v305 = vsel %vm301, %v225, 0.0
        %v306 = vsel %vm238, %v302, 0.0
        %v307 = vsel %vm238, %v303, 0.0
        %v308 = vadd.f32 %v306, %v307
        %v309 = vsel %vm238, %v304, 0.0
        %v310 = vadd.f32 %v308, %v309
        %v311 = vsel %vm238, %v305, 0.0
        %v312 = vadd.f32 %v310, %v311
        %v313 = vrot.slane %v312, 4
        %v314 = vadd.f32 %v312, %v313
        %v315 = vrot.slane %v314, 2
        %v316 = vadd.f32 %v314, %v315
        %v317 = vrot.slane %v316, 1
        %v318 = vadd.f32 %v316, %v317
        %v319 = vld [vmem:[#allocation4] sm:$0x1]
        %v320 = vadd.f32 %v319, %v318
        %321 = vst.msk [vmem:[#allocation4] sm:$0x1] %vm291, %v320
        // Predicated region
        $region33: #{tpu_custom_call.1} parent=27 // pred_check
          %p322 = pneg %p214
        $region34: #{tpu_custom_call.1} parent=27 // pred_check_branch
          %324 = sbr.rel (%p322) target = $region36
        $region35: #{tpu_custom_call.1} parent=27 // pred_region
          %v325 = vld [vmem:[#allocation2] sm:$0x1]
          %v326 = vld [vmem:[#allocation3] sm:$0x1]
          %v327 = vlog2.pop %v326
          %v328 = vmul.f32 %v327, 0.6931472
          %v329 = vadd.f32 %v325, %v328
          %v330 = vld [vmem:[#allocation4] sm:$0x1]
          %v331 = vsub.f32 %v329, %v330
          %332 = vst.msk [vmem:[%s194] sm:$0x1] %vm291, %v331
        $region36: #{tpu_custom_call.1} parent=27 // pred_fallthru
          _
        %s333 = sand.u32 %s103, 1
        %s334 = scalar_lea.sflag [#allocation6], %s333
        %s335 = sand.u32 %s103, 1
        %s336 = scalar_lea.vmem [#allocation5], %s335
        // Predicated region
        $region37: #{tpu_custom_call.1} parent=27 // pred_check
          %p337 = pneg %p113
        $region38: #{tpu_custom_call.1} parent=27 // pred_check_branch
          %339 = sbr.rel (%p337) target = $region40
        $region39: #{tpu_custom_call.1} parent=27 // pred_region
          %s341 = ssub.s32 16, 16
          %342 = vsyncadd %s334, %s341
          %s343 = sadd.s32 %s22, %s21
          %s344 = smul.addr %s343, 16
          %s345 = scalar_lea.hbm %s2, %s344
          %s347 = sshll.u32 %s336, 4
          %s348 = int_to_ptr.vmem [resolvable:$true] %s347
          %350 = dma.vmem_to_hbm [thread:$0]  %s348, 16, %s345, %s334
        $region40: #{tpu_custom_call.1} parent=27 // pred_fallthru
          _
      $region28: #{tpu_custom_call.1} parent=5 // pred_fallthru
        _
      %p351 = scmp.le.s32.totalorder 2, %s11
      // Predicated region
      $region41: #{tpu_custom_call.1} parent=5 // pred_check
        %p352 = pneg %p351
      $region42: #{tpu_custom_call.1} parent=5 // pred_check_branch
        %354 = sbr.rel (%p352) target = $region44
      $region43: #{tpu_custom_call.1} parent=5 // pred_region
        %s355 = ssub.s32 %s11, 2
        // Predicated region
        $region45: #{tpu_custom_call.1} parent=43 // pred_check
          %p356 = pneg %p119
        $region46: #{tpu_custom_call.1} parent=43 // pred_check_branch
          %358 = sbr.rel (%p356) target = $region48
        $region47: #{tpu_custom_call.1} parent=43 // pred_region
          %s359 = sand.u32 %s104, 1
          %s360 = scalar_lea.sflag [#allocation6], %s359
          %s361 = sand.u32 %s104, 1
          %s362 = scalar_lea.vmem [#allocation5], %s361
          %363 = dma.done %s360, 16
        $region48: #{tpu_custom_call.1} parent=43 // pred_fallthru
          _
      $region44: #{tpu_custom_call.1} parent=5 // pred_fallthru
        _
    $region6: #{tpu_custom_call.1} parent=1 // loop_footer
      %s15 = sadd.s32 1, %s11
    $region7: #{tpu_custom_call.1} parent=1 // loop_footer_branch
      %10 = sbr.rel target = $region3
    $region8: #{tpu_custom_call.1} parent=1 // loop_exit
      _
    %364 = vsyncpa [#allocation6], 1
    %s365 = scalar_lea.sflag [#allocation6], 1
    %366 = vsyncpa %s365, 1

</llo_original>
